<compile_context>
chip_gen: v7x
topology: tpu7x:2x2x1
jax: 0.10.0
libtpu: 0.0.40
codegen_flags: <defaults>
</compile_context>

<pallas_src>
import jax
import jax.numpy as jnp
from jax import lax
from jax.experimental import pallas as pl
from jax.experimental.pallas import tpu as pltpu

# ----------------------------- configuration --------------------------------
E_DIM = 3            # emotion_dim (valence, arousal, dominance)
E_PAD = 8            # padded emotion dim: [v, a, d, 1.0 (bias lane), 0, 0, 0, 0]
HIDDEN = 64          # hidden_size
N_HEADS = 4          # num_heads (HIDDEN % N_HEADS == 0)
D_HEAD = HIDDEN // N_HEADS
MEM_DIM = 32         # memory_dim
SEQ = 8              # number of memory-context tokens
OUT_PAD = 128        # packed output row: [fused(64) | attnw(8) | zeros(56)]
LANES = 128          # slab lane width

# Row offsets inside the single packed [304, 128] weight/bias slab.
# All offsets are multiples of 8 (sublane-aligned).
_EQ_OFF = 0                         # W_eq  (bias folded into row E_DIM)  rows   0:8
_KV_OFF = _EQ_OFF + E_PAD           # W_kv  (= [W_mem@Wk | W_mem@Wv])     rows   8:40
_F1_OFF = _KV_OFF + MEM_DIM         # W_f1  (= [Wf1a ; Wo@Wf1b])          rows  40:168
_F2_OFF = _F1_OFF + 2 * HIDDEN      # W_f2                                rows 168:232
_SEG_OFF = _F2_OFF + HIDDEN         # seg   [64,4] head indicator         rows 232:296
_B_OFF = _SEG_OFF + HIDDEN          # bias block [8,128]                  rows 296:304
_SLAB_ROWS = _B_OFF + 8             # 304


# ------------------------------- kernel -------------------------------------
def _emotional_memory_kernel(emo_ref, mem_ref, w_ref, out_ref):
    f32 = jnp.float32
    emo = emo_ref[...]                          # [1, E_PAD]  (lane E_DIM == 1.0)
    mem = mem_ref[...]                          # [S, MEM_DIM]

    # -- unpack the single weight slab (static, 8-aligned sublane slices) --
    w_eq = w_ref[_EQ_OFF:_EQ_OFF + E_PAD, :]                    # [8, 128]
    w_kv = w_ref[_KV_OFF:_KV_OFF + MEM_DIM, :]                  # [32, 128]
    w_f1 = w_ref[_F1_OFF:_F1_OFF + 2 * HIDDEN, 0:HIDDEN]        # [128, 64]
    w_f2 = w_ref[_F2_OFF:_F2_OFF + HIDDEN, 0:HIDDEN]            # [64, 64]
    seg = w_ref[_SEG_OFF:_SEG_OFF + HIDDEN, 0:N_HEADS]          # [64, 4]
    bias = w_ref[_B_OFF:_B_OFF + 8, :]                          # [8, 128]
    b_kv = bias[0:1, :]                                         # [1, 128]
    b_f12 = bias[1:2, :]                                        # [1, 128]
    b_f1 = b_f12[:, 0:HIDDEN]                                   # [1, 64]
    b_f2 = b_f12[:, HIDDEN:2 * HIDDEN]                          # [1, 64]

    # -- fused emotional embedding + query projection (bias via ones lane) --
    eq = jnp.dot(emo, w_eq, preferred_element_type=f32)         # [1, 2H]
    emb = eq[:, :HIDDEN]                        # [1, H]  (== emotional_embedding)
    q = eq[:, HIDDEN:]                          # [1, H]  (== emb @ Wq + bq)

    # -- fused K/V projection with memory_embedding folded in --
    kv = jnp.dot(mem, w_kv, preferred_element_type=f32) + b_kv  # [S, 2H]
    k = kv[:, :HIDDEN]                          # [S, H]
    v = kv[:, HIDDEN:]                          # [S, H]

    # -- per-head scores via block-diagonal segment reduction --
    scale = 1.0 / (D_HEAD ** 0.5)
    qk = (q * scale) * k                                              # [S, H]
    scores = jnp.dot(qk, seg, preferred_element_type=f32)             # [S, nh]

    # softmax over the key/sequence axis (axis 0), per head
    m = jnp.max(scores, axis=0, keepdims=True)
    e = jnp.exp(scores - m)
    s = jnp.sum(e, axis=0, keepdims=True)
    p = e * pl.reciprocal(s, approx=True)                             # [S, nh]

    # attention weights averaged over heads, emitted lane-dense as [1, S]
    avg = jnp.full((1, N_HEADS), 1.0 / N_HEADS, f32)
    attnw = lax.dot_general(avg, p, (((1,), (1,)), ((), ())),
                            preferred_element_type=f32)               # [1, S]

    # context: expand per-head probs to [S, H] (seg^T), reduce over sequence
    probs_e = lax.dot_general(p, seg, (((1,), (1,)), ((), ())),
                              preferred_element_type=f32)             # [S, H]
    ctx = jnp.sum(probs_e * v, axis=0, keepdims=True)                 # [1, H]

    # fusion MLP: cat([emb, ctx]) @ W_fuse1' (+ W_o folded in) -> ReLU -> W_f2
    cat = jnp.concatenate([emb, ctx], axis=1)                         # [1, 2H]
    h1 = jnp.maximum(jnp.dot(cat, w_f1, preferred_element_type=f32) + b_f1, 0.0)
    fused = jnp.dot(h1, w_f2, preferred_element_type=f32) + b_f2      # [1, H]

    # single lane-dense 128-wide output row: [fused | attnw | zero pad]
    pad = jnp.zeros((1, OUT_PAD - HIDDEN - SEQ), f32)
    out_ref[...] = jnp.concatenate([fused, attnw, pad], axis=1)


# ------------------------------- parameters ----------------------------------
def make_raw_params(key):
    """Deterministic synthetic parameters (stored pre-transposed to [in, out])."""
    ks = jax.random.split(key, 16)
    scale = 0.05
    p = {}
    p["w_emo"] = scale * jax.random.normal(ks[0], (E_DIM, HIDDEN), jnp.float32)
    p["b_emo"] = scale * jax.random.normal(ks[1], (1, HIDDEN), jnp.float32)
    p["w_mem"] = scale * jax.random.normal(ks[2], (MEM_DIM, HIDDEN), jnp.float32)
    p["b_mem"] = scale * jax.random.normal(ks[3], (1, HIDDEN), jnp.float32)
    p["wq"] = scale * jax.random.normal(ks[4], (HIDDEN, HIDDEN), jnp.float32)
    p["wk"] = scale * jax.random.normal(ks[5], (HIDDEN, HIDDEN), jnp.float32)
    p["wv"] = scale * jax.random.normal(ks[6], (HIDDEN, HIDDEN), jnp.float32)
    p["bq"] = scale * jax.random.normal(ks[7], (1, HIDDEN), jnp.float32)
    p["bk"] = scale * jax.random.normal(ks[8], (1, HIDDEN), jnp.float32)
    p["bv"] = scale * jax.random.normal(ks[9], (1, HIDDEN), jnp.float32)
    p["wo"] = scale * jax.random.normal(ks[10], (HIDDEN, HIDDEN), jnp.float32)
    p["bo"] = scale * jax.random.normal(ks[11], (1, HIDDEN), jnp.float32)
    p["wf1a"] = scale * jax.random.normal(ks[12], (HIDDEN, HIDDEN), jnp.float32)
    p["wf1b"] = scale * jax.random.normal(ks[13], (HIDDEN, HIDDEN), jnp.float32)
    p["bf1"] = scale * jax.random.normal(ks[14], (1, HIDDEN), jnp.float32)
    p["wf2"] = scale * jax.random.normal(ks[15], (HIDDEN, HIDDEN), jnp.float32)
    p["bf2"] = jnp.zeros((1, HIDDEN), jnp.float32)
    return p


def pack_params(p):
    """One-time host-side algebraic folding + packing into ONE [304,128] slab."""
    f32 = jnp.float32

    # emotional embedding + Q projection fused; biases folded into row E_DIM
    # (the padded emotion input carries 1.0 in lane E_DIM).
    w_eq = jnp.zeros((E_PAD, 2 * HIDDEN), f32)
    w_eq = w_eq.at[:E_DIM, :HIDDEN].set(p["w_emo"])
    w_eq = w_eq.at[:E_DIM, HIDDEN:].set(p["w_emo"] @ p["wq"])
    w_eq = w_eq.at[E_DIM, :HIDDEN].set(p["b_emo"][0])
    w_eq = w_eq.at[E_DIM, HIDDEN:].set((p["b_emo"] @ p["wq"] + p["bq"])[0])

    # memory embedding folded into K/V projections, fused: kv = mem @ W_kv + b_kv
    w_kv = jnp.concatenate([p["w_mem"] @ p["wk"], p["w_mem"] @ p["wv"]], axis=1)  # [32,128]
    b_kv = jnp.concatenate([p["b_mem"] @ p["wk"] + p["bk"],
                            p["b_mem"] @ p["wv"] + p["bv"]], axis=1)              # [1,128]

    # fusion layer 1 with attention out-projection (W_o, b_o) folded in
    w_f1 = jnp.concatenate([p["wf1a"], p["wo"] @ p["wf1b"]], axis=0)              # [128,64]
    b_f1 = p["bf1"] + p["bo"] @ p["wf1b"]                                         # [1,64]

    # block-diagonal head indicator: seg[d, h] = 1 iff lane d belongs to head h
    seg = (jnp.arange(HIDDEN)[:, None] // D_HEAD
           == jnp.arange(N_HEADS)[None, :]).astype(f32)                           # [64,4]

    def pad_lanes(x):
        return jnp.zeros((x.shape[0], LANES), f32).at[:, :x.shape[1]].set(x)

    bias_blk = jnp.zeros((8, LANES), f32)
    bias_blk = bias_blk.at[0:1, :].set(b_kv)
    bias_blk = bias_blk.at[1:2, :].set(jnp.concatenate([b_f1, p["bf2"]], axis=1))

    slab = jnp.concatenate([
        w_eq,                  # rows   0:8
        w_kv,                  # rows   8:40
        pad_lanes(w_f1),       # rows  40:168
        pad_lanes(p["wf2"]),   # rows 168:232
        pad_lanes(seg),        # rows 232:296
        bias_blk,              # rows 296:304
    ], axis=0)
    assert slab.shape == (_SLAB_ROWS, LANES)
    return slab


# ------------------------------- wrapper -------------------------------------
@jax.jit
def emotional_memory_forward(emo3, memory_context, w_slab):
    """emo3: [1, E_DIM] (valence, arousal, dominance), memory_context: [SEQ, MEM_DIM]."""
    # pad emotion row: [v, a, d, 1.0 (bias lane), 0...]
    emo_vals = jnp.concatenate(
        [emo3.astype(jnp.float32),
         jnp.ones((1, 1), jnp.float32),
         jnp.zeros((1, E_PAD - E_DIM - 1), jnp.float32)], axis=1)

    vmem = pltpu.MemorySpace.VMEM
    out = pl.pallas_call(
        _emotional_memory_kernel,
        out_shape=jax.ShapeDtypeStruct((1, OUT_PAD), jnp.float32),
        in_specs=[pl.BlockSpec(memory_space=vmem)] * 3,
        out_specs=pl.BlockSpec(memory_space=vmem),
    )(emo_vals, memory_context, w_slab)
    fused_state = out[:, :HIDDEN]                          # [1, HIDDEN]
    attention_weights = out[:, HIDDEN:HIDDEN + SEQ]        # [1, SEQ]  (PyTorch (L, S))
    return fused_state, attention_weights


def reference_forward(emo3, memory_context, p):
    """Pure-JAX reference mirroring the PyTorch forward (un-folded weights)."""
    emb = emo3 @ p["w_emo"] + p["b_emo"]
    mem_e = memory_context @ p["w_mem"] + p["b_mem"]
    q = (emb @ p["wq"] + p["bq"]).reshape(N_HEADS, D_HEAD)
    k = (mem_e @ p["wk"] + p["bk"]).reshape(SEQ, N_HEADS, D_HEAD)
    v = (mem_e @ p["wv"] + p["bv"]).reshape(SEQ, N_HEADS, D_HEAD)
    scores = jnp.einsum("hd,shd->hs", q, k) / (D_HEAD ** 0.5)          # [h, S]
    probs = jax.nn.softmax(scores, axis=-1)
    ctx = jnp.einsum("hs,shd->hd", probs, v).reshape(1, HIDDEN)
    attn_out = ctx @ p["wo"] + p["bo"]
    h1 = jnp.maximum(emb @ p["wf1a"] + attn_out @ p["wf1b"] + p["bf1"], 0.0)
    fused = h1 @ p["wf2"] + p["bf2"]
    attn_w = jnp.mean(probs, axis=0, keepdims=True)                    # [1, S]
    return fused, attn_w


if __name__ == "__main__":
    key = jax.random.PRNGKey(0)
    k_par, k_emo, k_mem = jax.random.split(key, 3)
    raw_params = make_raw_params(k_par)
    w_slab = pack_params(raw_params)

    # emotional_input {'valence','arousal','dominance'} -> [1, 3]
    emo3 = jax.random.uniform(k_emo, (1, E_DIM), jnp.float32, minval=-1.0, maxval=1.0)
    memory_context = jax.random.normal(k_mem, (SEQ, MEM_DIM), jnp.float32)

    fused_state, attention_weights = emotional_memory_forward(emo3, memory_context, w_slab)
    jax.block_until_ready((fused_state, attention_weights))

    # validate folded/packed kernel against the pure-JAX (un-folded) reference
    ref_fused, ref_attnw = reference_forward(emo3, memory_context, raw_params)
    assert jnp.allclose(fused_state, ref_fused, atol=3e-3, rtol=3e-3)
    assert jnp.allclose(attention_weights, ref_attnw, atol=3e-3, rtol=3e-3)

    # host-side state bookkeeping (glue, mirrors _update_state / get_state)
    attention_state = {"attention_level": 0.8, "stress_level": 0.2}
    state = {
        "emotional_valence": float(emo3[0, 0]),
        "emotional_arousal": float(emo3[0, 1]),
        "emotional_dominance": float(emo3[0, 2]),
        "attention_level": attention_state["attention_level"],
        "stress_level": attention_state["stress_level"],
        "memory_coherence": float(jnp.mean(attention_weights)),
    }
    # TODO(synk): memory_buffer / _store_experience / _is_significant_experience are
    # host-side Python list/state management, not kernel work.
    _ = state

    print("KERNEL_OK")
</pallas_src>

<mosaic_0001>
module attributes {stable_mosaic.version = 11 : i64} {
  func.func @_emotional_memory_kernel(%arg0: memref<1x8xf32, #tpu.memory_space<vmem>>, %arg1: memref<8x32xf32, #tpu.memory_space<vmem>>, %arg2: memref<304x128xf32, #tpu.memory_space<vmem>>, %arg3: memref<1x128xf32, #tpu.memory_space<vmem>>) attributes {dimension_semantics = [], scalar_prefetch = 0 : i64, scratch_operands = 0 : i64, tpu.core_type = #tpu.core_type<tc>} {
    %c0 = arith.constant 0 : index
    %c0_0 = arith.constant 0 : index
    %0 = vector.load %arg0[%c0, %c0_0] : memref<1x8xf32, #tpu.memory_space<vmem>>, vector<1x8xf32>
    %c0_1 = arith.constant 0 : index
    %c0_2 = arith.constant 0 : index
    %1 = vector.load %arg1[%c0_1, %c0_2] : memref<8x32xf32, #tpu.memory_space<vmem>>, vector<8x32xf32>
    %c0_3 = arith.constant 0 : index
    %c0_4 = arith.constant 0 : index
    %2 = vector.load %arg2[%c0_3, %c0_4] : memref<304x128xf32, #tpu.memory_space<vmem>>, vector<8x128xf32>
    %c8 = arith.constant 8 : index
    %c0_5 = arith.constant 0 : index
    %3 = vector.load %arg2[%c8, %c0_5] : memref<304x128xf32, #tpu.memory_space<vmem>>, vector<32x128xf32>
    %c40 = arith.constant 40 : index
    %c0_6 = arith.constant 0 : index
    %4 = vector.load %arg2[%c40, %c0_6] : memref<304x128xf32, #tpu.memory_space<vmem>>, vector<128x64xf32>
    %c168 = arith.constant 168 : index
    %c0_7 = arith.constant 0 : index
    %5 = vector.load %arg2[%c168, %c0_7] : memref<304x128xf32, #tpu.memory_space<vmem>>, vector<64x64xf32>
    %c232 = arith.constant 232 : index
    %c0_8 = arith.constant 0 : index
    %6 = vector.load %arg2[%c232, %c0_8] : memref<304x128xf32, #tpu.memory_space<vmem>>, vector<64x4xf32>
    %c296 = arith.constant 296 : index
    %c0_9 = arith.constant 0 : index
    %7 = vector.load %arg2[%c296, %c0_9] : memref<304x128xf32, #tpu.memory_space<vmem>>, vector<8x128xf32>
    %8 = vector.extract_strided_slice %7 {offsets = [0, 0], sizes = [1, 128], strides = [1, 1]} : vector<8x128xf32> to vector<1x128xf32>
    %9 = vector.extract_strided_slice %7 {offsets = [1, 0], sizes = [1, 128], strides = [1, 1]} : vector<8x128xf32> to vector<1x128xf32>
    %10 = vector.extract_strided_slice %9 {offsets = [0, 0], sizes = [1, 64], strides = [1, 1]} : vector<1x128xf32> to vector<1x64xf32>
    %11 = vector.extract_strided_slice %9 {offsets = [0, 64], sizes = [1, 64], strides = [1, 1]} : vector<1x128xf32> to vector<1x64xf32>
    %cst = arith.constant dense<0.000000e+00> : vector<1x128xf32>
    %12 = tpu.matmul %0, %2, %cst {dimension_numbers = #tpu.dot_dimension_numbers<[1], [0], [0], [1], [0, 0, 1, 1], [], []>} : vector<1x8xf32>, vector<8x128xf32>, vector<1x128xf32> -> vector<1x128xf32>
    %13 = vector.extract_strided_slice %12 {offsets = [0, 0], sizes = [1, 64], strides = [1, 1]} : vector<1x128xf32> to vector<1x64xf32>
    %14 = vector.extract_strided_slice %12 {offsets = [0, 64], sizes = [1, 64], strides = [1, 1]} : vector<1x128xf32> to vector<1x64xf32>
    %cst_10 = arith.constant dense<0.000000e+00> : vector<8x128xf32>
    %15 = tpu.matmul %1, %3, %cst_10 {dimension_numbers = #tpu.dot_dimension_numbers<[1], [0], [0], [1], [0, 0, 1, 1], [], []>} : vector<8x32xf32>, vector<32x128xf32>, vector<8x128xf32> -> vector<8x128xf32>
    %16 = vector.broadcast %8 : vector<1x128xf32> to vector<8x128xf32>
    %17 = arith.addf %15, %16 : vector<8x128xf32>
    %18 = vector.extract_strided_slice %17 {offsets = [0, 0], sizes = [8, 64], strides = [1, 1]} : vector<8x128xf32> to vector<8x64xf32>
    %19 = vector.extract_strided_slice %17 {offsets = [0, 64], sizes = [8, 64], strides = [1, 1]} : vector<8x128xf32> to vector<8x64xf32>
    %cst_11 = arith.constant 2.500000e-01 : f32
    %20 = vector.broadcast %cst_11 : f32 to vector<1x64xf32>
    %21 = arith.mulf %14, %20 : vector<1x64xf32>
    %22 = vector.broadcast %21 : vector<1x64xf32> to vector<8x64xf32>
    %23 = arith.mulf %22, %18 : vector<8x64xf32>
    %cst_12 = arith.constant dense<0.000000e+00> : vector<8x4xf32>
    %24 = tpu.matmul %23, %6, %cst_12 {dimension_numbers = #tpu.dot_dimension_numbers<[1], [0], [0], [1], [0, 0, 1, 1], [], []>} : vector<8x64xf32>, vector<64x4xf32>, vector<8x4xf32> -> vector<8x4xf32>
    %cst_13 = arith.constant dense<0xFF800000> : vector<4xf32>
    %25 = vector.multi_reduction <maximumf>, %24, %cst_13 [0] : vector<8x4xf32> to vector<4xf32>
    %26 = vector.shape_cast %25 : vector<4xf32> to vector<1x4xf32>
    %27 = vector.broadcast %26 : vector<1x4xf32> to vector<8x4xf32>
    %28 = arith.subf %24, %27 : vector<8x4xf32>
    %29 = math.exp %28 : vector<8x4xf32>
    %cst_14 = arith.constant dense<0.000000e+00> : vector<4xf32>
    %30 = vector.multi_reduction <add>, %29, %cst_14 [0] : vector<8x4xf32> to vector<4xf32>
    %31 = vector.shape_cast %30 : vector<4xf32> to vector<1x4xf32>
    %32 = tpu.reciprocal %31 {approx = true} : vector<1x4xf32> -> vector<1x4xf32>
    %33 = vector.broadcast %32 : vector<1x4xf32> to vector<8x4xf32>
    %34 = arith.mulf %29, %33 : vector<8x4xf32>
    %cst_15 = arith.constant 2.500000e-01 : f32
    %35 = vector.broadcast %cst_15 : f32 to vector<1x4xf32>
    %cst_16 = arith.constant dense<0.000000e+00> : vector<1x8xf32>
    %36 = tpu.matmul %35, %34, %cst_16 {dimension_numbers = #tpu.dot_dimension_numbers<[1], [1], [0], [0], [0, 0, 1, 0], [], []>} : vector<1x4xf32>, vector<8x4xf32>, vector<1x8xf32> -> vector<1x8xf32>
    %cst_17 = arith.constant dense<0.000000e+00> : vector<8x64xf32>
    %37 = tpu.matmul %34, %6, %cst_17 {dimension_numbers = #tpu.dot_dimension_numbers<[1], [1], [0], [0], [0, 0, 1, 0], [], []>} : vector<8x4xf32>, vector<64x4xf32>, vector<8x64xf32> -> vector<8x64xf32>
    %38 = arith.mulf %37, %19 : vector<8x64xf32>
    %cst_18 = arith.constant dense<0.000000e+00> : vector<64xf32>
    %39 = vector.multi_reduction <add>, %38, %cst_18 [0] : vector<8x64xf32> to vector<64xf32>
    %40 = vector.shape_cast %39 : vector<64xf32> to vector<1x64xf32>
    %41 = tpu.concatenate %13, %40 in 1 : vector<1x64xf32>, vector<1x64xf32> -> vector<1x128xf32>
    %cst_19 = arith.constant dense<0.000000e+00> : vector<1x64xf32>
    %42 = tpu.matmul %41, %4, %cst_19 {dimension_numbers = #tpu.dot_dimension_numbers<[1], [0], [0], [1], [0, 0, 1, 1], [], []>} : vector<1x128xf32>, vector<128x64xf32>, vector<1x64xf32> -> vector<1x64xf32>
    %43 = arith.addf %42, %10 : vector<1x64xf32>
    %cst_20 = arith.constant 0.000000e+00 : f32
    %44 = vector.broadcast %cst_20 : f32 to vector<1x64xf32>
    %45 = arith.maximumf %43, %44 : vector<1x64xf32>
    %cst_21 = arith.constant dense<0.000000e+00> : vector<1x64xf32>
    %46 = tpu.matmul %45, %5, %cst_21 {dimension_numbers = #tpu.dot_dimension_numbers<[1], [0], [0], [1], [0, 0, 1, 1], [], []>} : vector<1x64xf32>, vector<64x64xf32>, vector<1x64xf32> -> vector<1x64xf32>
    %47 = arith.addf %46, %11 : vector<1x64xf32>
    %cst_22 = arith.constant 0.000000e+00 : f32
    %48 = vector.broadcast %cst_22 : f32 to vector<1x56xf32>
    %49 = tpu.concatenate %47, %36, %48 in 1 : vector<1x64xf32>, vector<1x8xf32>, vector<1x56xf32> -> vector<1x128xf32>
    %c0_23 = arith.constant 0 : index
    %c0_24 = arith.constant 0 : index
    %50 = vector.load %arg3[%c0_23, %c0_24] : memref<1x128xf32, #tpu.memory_space<vmem>>, vector<1x128xf32>
    tpu.vector_store %arg3[%c0_23, %c0_24], %49 {strides = array<i32>} : memref<1x128xf32, #tpu.memory_space<vmem>>, vector<1x128xf32>,
    return
  }
}

</mosaic_0001>

<llo_original>
// kernel: emotional_memory_forward.1
$region0: #{emotional_memory_forward.1}
  #allocation0 [shape = 'u32[]', space=smem, size = 0x4, offset = 0x4, fixed_abs, tag = 'smem constant byte address 0x4 - core index']
  #allocation1 [shape = 'u32[144,128]{1,0:T(1,128)}', space=vmem, size = 0x12000, scoped, tag = 'internal scratch']
  %s0 = inlined_call_operand.vmem [shape: f32[1,8], index: 0, kind: input, shape index: {}]
  %s1 = inlined_call_operand.vmem [shape: f32[8,32], index: 1, kind: input, shape index: {}]
  %s2 = inlined_call_operand.hbm [shape: f32[304,128], index: 2, kind: input, shape index: {}]
  %s3 = inlined_call_operand.vmem [shape: f32[1,128], index: 3, kind: output, shape index: {}]
  %s4 = sld [smem:[#allocation0]]
  $region26: #{emotional_memory_forward.1} parent=0
    _
  %s6 = ssub.s32 1, %s4
  %s7 = scalar_select 0, %s6, %s4
  $region1: #{emotional_memory_forward.1} parent=0
    #allocation2 [shape = 'u8[155648]{0}', space=vmem, size = 0x26000, scoped, tag = 'input window, operand 2, single buffered']
    #allocation3 [shape = 's32[1]{0}', space=sflag, size = 0x4, scoped, tag = 'scoped memory for emotional_memory_forward.1']
    %8 = vsyncpa [#allocation3], 0
    // Predicated region
    $region2: #{emotional_memory_forward.1} parent=1 // pred_check
      _
    $region3: #{emotional_memory_forward.1} parent=1 // pred_check_branch
      %10 = sbr.rel (0) target = $region5
    $region4: #{emotional_memory_forward.1} parent=1 // pred_region
      _
    $region5: #{emotional_memory_forward.1} parent=1 // pred_fallthru
      _
    // Predicated region
    $region6: #{emotional_memory_forward.1} parent=1 // pred_check
      _
    $region7: #{emotional_memory_forward.1} parent=1 // pred_check_branch
      %12 = sbr.rel (0) target = $region9
    $region8: #{emotional_memory_forward.1} parent=1 // pred_region
      _
    $region9: #{emotional_memory_forward.1} parent=1 // pred_fallthru
      _
    // Predicated region
    $region10: #{emotional_memory_forward.1} parent=1 // pred_check
      _
    $region11: #{emotional_memory_forward.1} parent=1 // pred_check_branch
      %14 = sbr.rel (0) target = $region13
    $region12: #{emotional_memory_forward.1} parent=1 // pred_region
      %s16 = ssub.s32 4864, 4864
      %17 = vsyncadd [#allocation3], %s16
      %s18 = sshll.u32 [#allocation2], 4
      %s19 = int_to_ptr.vmem [resolvable:$true] %s18
      %24 = dma.hbm_to_vmem [thread:$0]  %s2, 4864, %s19, [#allocation3], 128, 128, 8
    $region13: #{emotional_memory_forward.1} parent=1 // pred_fallthru
      _
    // Predicated region
    $region14: #{emotional_memory_forward.1} parent=1 // pred_check
      _
    $region15: #{emotional_memory_forward.1} parent=1 // pred_check_branch
      %26 = sbr.rel (0) target = $region17
    $region16: #{emotional_memory_forward.1} parent=1 // pred_region
      %27 = dma.done [#allocation3], 4864
    $region17: #{emotional_memory_forward.1} parent=1 // pred_fallthru
      _
    %v28 = vld [vmem:[%s0] sm:$0x1]
    %v29 = vld [vmem:[%s1] sm:$0xff]
    %v30 = vld [vmem:[#allocation2] sm:$0xff]
    %v31 = vld [vmem:[#allocation2 + $0x8] sm:$0xff]
    %v32 = vld [vmem:[#allocation2 + $0x10] sm:$0xff]
    %v33 = vld [vmem:[#allocation2 + $0x18] sm:$0xff]
    %v34 = vld [vmem:[#allocation2 + $0x20] sm:$0xff]
    %v35 = vld [vmem:[#allocation2 + $0x28] sm:$0xff]
    %v36 = vld [vmem:[#allocation2 + $0x30] sm:$0xff]
    %v37 = vld [vmem:[#allocation2 + $0x38] sm:$0xff]
    %v38 = vld [vmem:[#allocation2 + $0x40] sm:$0xff]
    %v39 = vld [vmem:[#allocation2 + $0x48] sm:$0xff]
    %v40 = vld [vmem:[#allocation2 + $0x50] sm:$0xff]
    %v41 = vld [vmem:[#allocation2 + $0x58] sm:$0xff]
    %v42 = vld [vmem:[#allocation2 + $0x60] sm:$0xff]
    %v43 = vld [vmem:[#allocation2 + $0x68] sm:$0xff]
    %v44 = vld [vmem:[#allocation2 + $0x70] sm:$0xff]
    %v45 = vld [vmem:[#allocation2 + $0x78] sm:$0xff]
    %v46 = vld [vmem:[#allocation2 + $0x80] sm:$0xff]
    %v47 = vld [vmem:[#allocation2 + $0x88] sm:$0xff]
    %v48 = vld [vmem:[#allocation2 + $0x90] sm:$0xff]
    %v49 = vld [vmem:[#allocation2 + $0x98] sm:$0xff]
    %v50 = vld [vmem:[#allocation2 + $0xa0] sm:$0xff]
    %v51 = vld [vmem:[#allocation2 + $0xa8] sm:$0xff]
    %v52 = vld [vmem:[#allocation2 + $0xb0] sm:$0xff]
    %v53 = vld [vmem:[#allocation2 + $0xb8] sm:$0xff]
    %v54 = vld [vmem:[#allocation2 + $0xc0] sm:$0xff]
    %v55 = vld [vmem:[#allocation2 + $0xc8] sm:$0xff]
    %v56 = vld [vmem:[#allocation2 + $0xd0] sm:$0xff]
    %v57 = vld [vmem:[#allocation2 + $0xd8] sm:$0xff]
    %v58 = vld [vmem:[#allocation2 + $0xe0] sm:$0xff]
    %v59 = vld [vmem:[#allocation2 + $0xe8] sm:$0xff]
    %v60 = vld [vmem:[#allocation2 + $0xf0] sm:$0xff]
    %v61 = vld [vmem:[#allocation2 + $0xf8] sm:$0xff]
    %v62 = vld [vmem:[#allocation2 + $0x100] sm:$0xff]
    %v63 = vld [vmem:[#allocation2 + $0x108] sm:$0xff]
    %v64 = vld [vmem:[#allocation2 + $0x110] sm:$0xff]
    %v65 = vld [vmem:[#allocation2 + $0x118] sm:$0xff]
    %v66 = vld [vmem:[#allocation2 + $0x120] sm:$0xff]
    %v67 = vld [vmem:[#allocation2 + $0x128] sm:$0xff]
    %vm68 = vcmask 64512
    %v70 = vsel %vm68, %v28, 0
    %72 = vmatprep.subr.mxu0 0.0
    %73 = vmatpush1.msra.mxu0 %v30
    %74 = vmatprep.subr.mxu0 0.0
    %75 = vmatpush1.msra.mxu0 0.0
    %76 = vmatprep.subr.mxu0 0.0
    %77 = vmatpush1.msra.mxu0 0.0
    %78 = vmatprep.subr.mxu0 0.0
    %79 = vmatpush1.msra.mxu0 0.0
    %80 = vmatprep.subr.mxu0 0.0
    %81 = vmatpush1.msra.mxu0 0.0
    %82 = vmatprep.subr.mxu0 0.0
    %83 = vmatpush1.msra.mxu0 0.0
    %84 = vmatprep.subr.mxu0 0.0
    %85 = vmatpush1.msra.mxu0 0.0
    %86 = vmatprep.subr.mxu0 0.0
    %87 = vmatpush1.msra.mxu0 0.0
    %88 = vmatprep.subr.mxu0 0.0
    %89 = vmatpush1.msra.mxu0 0.0
    %90 = vmatprep.subr.mxu0 0.0
    %91 = vmatpush1.msra.mxu0 0.0
    %92 = vmatprep.subr.mxu0 0.0
    %93 = vmatpush1.msra.mxu0 0.0
    %94 = vmatprep.subr.mxu0 0.0
    %95 = vmatpush1.msra.mxu0 0.0
    %96 = vmatprep.subr.mxu0 0.0
    %97 = vmatpush1.msra.mxu0 0.0
    %98 = vmatprep.subr.mxu0 0.0
    %99 = vmatpush1.msra.mxu0 0.0
    %100 = vmatprep.subr.mxu0 0.0
    %101 = vmatpush1.msra.mxu0 0.0
    %102 = vmatprep.subr.mxu0 0.0
    %103 = vmatpush1.msra.mxu0 0.0
    %104 = vmatprep.subr.mxu0 0.0
    %105 = vmatpush1.msra.mxu0 0.0
    %106 = vmatprep.subr.mxu0 0.0
    %107 = vmatpush1.msra.mxu0 0.0
    %108 = vmatprep.subr.mxu0 0.0
    %109 = vmatpush1.msra.mxu0 0.0
    %110 = vmatprep.subr.mxu0 0.0
    %111 = vmatpush1.msra.mxu0 0.0
    %112 = vmatprep.subr.mxu0 0.0
    %113 = vmatpush1.msra.mxu0 0.0
    %114 = vmatprep.subr.mxu0 0.0
    %115 = vmatpush1.msra.mxu0 0.0
    %116 = vmatprep.subr.mxu0 0.0
    %117 = vmatpush1.msra.mxu0 0.0
    %118 = vmatprep.subr.mxu0 0.0
    %119 = vmatpush1.msra.mxu0 0.0
    %120 = vmatprep.subr.mxu0 0.0
    %121 = vmatpush1.msra.mxu0 0.0
    %122 = vmatprep.subr.mxu0 0.0
    %123 = vmatpush1.msra.mxu0 0.0
    %124 = vmatprep.subr.mxu0 0.0
    %125 = vmatpush1.msra.mxu0 0.0
    %126 = vmatprep.subr.mxu0 0.0
    %127 = vmatpush1.msra.mxu0 0.0
    %128 = vmatprep.subr.mxu0 0.0
    %129 = vmatpush1.msra.mxu0 0.0
    %130 = vmatprep.subr.mxu0 0.0
    %131 = vmatpush1.msra.mxu0 0.0
    %132 = vmatprep.subr.mxu0 0.0
    %133 = vmatpush1.msra.mxu0 0.0
    %134 = vmatprep.subr.mxu0 0.0
    %135 = vmatpush1.msra.mxu0 0.0
    %136 = vmatprep.mubr.f32.mxu0 0.0
    %137 = vmatmul.mubr.f32.gmra.mrb[0].mxu0 %v70
    %v138 = vpop.f32.mrb[0].mxu0
    %v139 = vadd.f32 0.0, %v138
    %v140 = vpop.f32.mrb[0].mxu0
    %141 = vdwg.mxu0
    %v142 = vlaneseq
    %v143 = vshrl.u32 %v142, 7
    %v144 = vsub.s32 0, %v143
    %v145 = vrot.slane %v67, %v144
    %vm146 = vcmask 261120
    %v148 = vsel %vm146, %v29, 0
    %150 = vmatprep.subr.mxu0 0.0
    %151 = vmatpush1.msra.mxu0 %v31
    %152 = vmatprep.subr.mxu0 0.0
    %153 = vmatpush1.msra.mxu0 %v32
    %154 = vmatprep.subr.mxu0 0.0
    %155 = vmatpush1.msra.mxu0 %v33
    %156 = vmatprep.subr.mxu0 0.0
    %157 = vmatpush1.msra.mxu0 %v34
    %158 = vmatprep.subr.mxu0 0.0
    %159 = vmatpush1.msra.mxu0 0.0
    %160 = vmatprep.subr.mxu0 0.0
    %161 = vmatpush1.msra.mxu0 0.0
    %162 = vmatprep.subr.mxu0 0.0
    %163 = vmatpush1.msra.mxu0 0.0
    %164 = vmatprep.subr.mxu0 0.0
    %165 = vmatpush1.msra.mxu0 0.0
    %166 = vmatprep.subr.mxu0 0.0
    %167 = vmatpush1.msra.mxu0 0.0
    %168 = vmatprep.subr.mxu0 0.0
    %169 = vmatpush1.msra.mxu0 0.0
    %170 = vmatprep.subr.mxu0 0.0
    %171 = vmatpush1.msra.mxu0 0.0
    %172 = vmatprep.subr.mxu0 0.0
    %173 = vmatpush1.msra.mxu0 0.0
    %174 = vmatprep.subr.mxu0 0.0
    %175 = vmatpush1.msra.mxu0 0.0
    %176 = vmatprep.subr.mxu0 0.0
    %177 = vmatpush1.msra.mxu0 0.0
    %178 = vmatprep.subr.mxu0 0.0
    %179 = vmatpush1.msra.mxu0 0.0
    %180 = vmatprep.subr.mxu0 0.0
    %181 = vmatpush1.msra.mxu0 0.0
    %182 = vmatprep.subr.mxu0 0.0
    %183 = vmatpush1.msra.mxu0 0.0
    %184 = vmatprep.subr.mxu0 0.0
    %185 = vmatpush1.msra.mxu0 0.0
    %186 = vmatprep.subr.mxu0 0.0
    %187 = vmatpush1.msra.mxu0 0.0
    %188 = vmatprep.subr.mxu0 0.0
    %189 = vmatpush1.msra.mxu0 0.0
    %190 = vmatprep.subr.mxu0 0.0
    %191 = vmatpush1.msra.mxu0 0.0
    %192 = vmatprep.subr.mxu0 0.0
    %193 = vmatpush1.msra.mxu0 0.0
    %194 = vmatprep.subr.mxu0 0.0
    %195 = vmatpush1.msra.mxu0 0.0
    %196 = vmatprep.subr.mxu0 0.0
    %197 = vmatpush1.msra.mxu0 0.0
    %198 = vmatprep.subr.mxu0 0.0
    %199 = vmatpush1.msra.mxu0 0.0
    %200 = vmatprep.subr.mxu0 0.0
    %201 = vmatpush1.msra.mxu0 0.0
    %202 = vmatprep.subr.mxu0 0.0
    %203 = vmatpush1.msra.mxu0 0.0
    %204 = vmatprep.subr.mxu0 0.0
    %205 = vmatpush1.msra.mxu0 0.0
    %206 = vmatprep.subr.mxu0 0.0
    %207 = vmatpush1.msra.mxu0 0.0
    %208 = vmatprep.subr.mxu0 0.0
    %209 = vmatpush1.msra.mxu0 0.0
    %210 = vmatprep.subr.mxu0 0.0
    %211 = vmatpush1.msra.mxu0 0.0
    %212 = vmatprep.subr.mxu0 0.0
    %213 = vmatpush1.msra.mxu0 0.0
    %214 = vmatprep.mubr.f32.mxu0 0.0
    %215 = vmatmul.mubr.f32.gmra.mrb[0].mxu0 %v148
    %v216 = vpop.f32.mrb[0].mxu0
    %v217 = vadd.f32 %v145, %v216
    %v218 = vpop.f32.mrb[0].mxu0
    %219 = vdwg.mxu0
    %v220 = vmul.f32 %v139, 0.25
    %v221 = vlaneseq
    %v222 = vshrl.u32 %v221, 7
    %v223 = vsub.s32 0, %v222
    %v224 = vrot.slane %v220, %v223
    %226 = vrot.lane.b32.xlu0 %v217, 64
    %v227 = vpop.permute.xlu0 %226
    %v229 = vmul.f32 %v224, %v227
    %231 = vrot.lane.b32.xlu0 %v229, 64
    %v232 = vpop.permute.xlu0 %231
    %vm233 = vcmask 523264
    %v234 = vsel %vm233, %v232, 0
    %236 = vmatprep.subr.mxu0 0.0
    %237 = vmatpush1.msra.mxu0 %v59
    %238 = vmatprep.subr.mxu0 0.0
    %239 = vmatpush1.msra.mxu0 %v60
    %240 = vmatprep.subr.mxu0 0.0
    %241 = vmatpush1.msra.mxu0 %v61
    %242 = vmatprep.subr.mxu0 0.0
    %243 = vmatpush1.msra.mxu0 %v62
    %244 = vmatprep.subr.mxu0 0.0
    %245 = vmatpush1.msra.mxu0 %v63
    %246 = vmatprep.subr.mxu0 0.0
    %247 = vmatpush1.msra.mxu0 %v64
    %248 = vmatprep.subr.mxu0 0.0
    %249 = vmatpush1.msra.mxu0 %v65
    %250 = vmatprep.subr.mxu0 0.0
    %251 = vmatpush1.msra.mxu0 %v66
    %252 = vmatprep.subr.mxu0 0.0
    %253 = vmatpush1.msra.mxu0 0.0
    %254 = vmatprep.subr.mxu0 0.0
    %255 = vmatpush1.msra.mxu0 0.0
    %256 = vmatprep.subr.mxu0 0.0
    %257 = vmatpush1.msra.mxu0 0.0
    %258 = vmatprep.subr.mxu0 0.0
    %259 = vmatpush1.msra.mxu0 0.0
    %260 = vmatprep.subr.mxu0 0.0
    %261 = vmatpush1.msra.mxu0 0.0
    %262 = vmatprep.subr.mxu0 0.0
    %263 = vmatpush1.msra.mxu0 0.0
    %264 = vmatprep.subr.mxu0 0.0
    %265 = vmatpush1.msra.mxu0 0.0
    %266 = vmatprep.subr.mxu0 0.0
    %267 = vmatpush1.msra.mxu0 0.0
    %268 = vmatprep.subr.mxu0 0.0
    %269 = vmatpush1.msra.mxu0 0.0
    %270 = vmatprep.subr.mxu0 0.0
    %271 = vmatpush1.msra.mxu0 0.0
    %272 = vmatprep.subr.mxu0 0.0
    %273 = vmatpush1.msra.mxu0 0.0
    %274 = vmatprep.subr.mxu0 0.0
    %275 = vmatpush1.msra.mxu0 0.0
    %276 = vmatprep.subr.mxu0 0.0
    %277 = vmatpush1.msra.mxu0 0.0
    %278 = vmatprep.subr.mxu0 0.0
    %279 = vmatpush1.msra.mxu0 0.0
    %280 = vmatprep.subr.mxu0 0.0
    %281 = vmatpush1.msra.mxu0 0.0
    %282 = vmatprep.subr.mxu0 0.0
    %283 = vmatpush1.msra.mxu0 0.0
    %284 = vmatprep.subr.mxu0 0.0
    %285 = vmatpush1.msra.mxu0 0.0
    %286 = vmatprep.subr.mxu0 0.0
    %287 = vmatpush1.msra.mxu0 0.0
    %288 = vmatprep.subr.mxu0 0.0
    %289 = vmatpush1.msra.mxu0 0.0
    %290 = vmatprep.subr.mxu0 0.0
    %291 = vmatpush1.msra.mxu0 0.0
    %292 = vmatprep.subr.mxu0 0.0
    %293 = vmatpush1.msra.mxu0 0.0
    %294 = vmatprep.subr.mxu0 0.0
    %295 = vmatpush1.msra.mxu0 0.0
    %296 = vmatprep.subr.mxu0 0.0
    %297 = vmatpush1.msra.mxu0 0.0
    %298 = vmatprep.subr.mxu0 0.0
    %299 = vmatpush1.msra.mxu0 0.0
    %300 = vmatprep.mubr.f32.mxu0 0.0
    %301 = vmatmul.mubr.f32.gmra.mrb[0].mxu0 %v234
    %v302 = vpop.f32.mrb[0].mxu0
    %v303 = vadd.f32 0.0, %v302
    %v304 = vpop.f32.mrb[0].mxu0
    %305 = vdwg.mxu0
    %vm306 = vcmask 31744
    %v307 = vsel %vm306, %v303, -inf
    %v308 = vrot.slane %v307, 4
    %v309 = vmax.f32 %v307, %v308
    %v310 = vrot.slane %v309, 2
    %v311 = vmax.f32 %v309, %v310
    %v312 = vrot.slane %v311, 1
    %v313 = vmax.f32 %v311, %v312
    %v314 = vsub.f32 %v303, %v313
    %v315 = vmul.f32 %v314, 1.442695
    %v316 = vpow.pop %v315
    %v317 = vsel %vm306, %v316, 0.0
    %v318 = vrot.slane %v317, 4
    %v319 = vadd.f32 %v317, %v318
    %v320 = vrot.slane %v319, 2
    %v321 = vadd.f32 %v319, %v320
    %v322 = vrot.slane %v321, 1
    %v323 = vadd.f32 %v321, %v322
    %v324 = vrcp.pop %v323
    %v325 = vmul.f32 %v316, %v324
    %v327 = vsel %vm306, 0.25, 0
    %v330 = vsel %vm306, %v325, 0
    %332 = vmatprep.subr.mxu0 0.0
    %333 = vmatpush1.xpose.msra.mxu0 %v330
    %334 = vmatprep.subr.mxu0 0.0
    %335 = vmatpush1.xpose.msra.mxu0 0.0
    %336 = vmatprep.subr.mxu0 0.0
    %337 = vmatpush1.xpose.msra.mxu0 0.0
    %338 = vmatprep.subr.mxu0 0.0
    %339 = vmatpush1.xpose.msra.mxu0 0.0
    %340 = vmatprep.subr.mxu0 0.0
    %341 = vmatpush1.xpose.msra.mxu0 0.0
    %342 = vmatprep.subr.mxu0 0.0
    %343 = vmatpush1.xpose.msra.mxu0 0.0
    %344 = vmatprep.subr.mxu0 0.0
    %345 = vmatpush1.xpose.msra.mxu0 0.0
    %346 = vmatprep.subr.mxu0 0.0
    %347 = vmatpush1.xpose.msra.mxu0 0.0
    %348 = vmatprep.subr.mxu0 0.0
    %349 = vmatpush1.xpose.msra.mxu0 0.0
    %350 = vmatprep.subr.mxu0 0.0
    %351 = vmatpush1.xpose.msra.mxu0 0.0
    %352 = vmatprep.subr.mxu0 0.0
    %353 = vmatpush1.xpose.msra.mxu0 0.0
    %354 = vmatprep.subr.mxu0 0.0
    %355 = vmatpush1.xpose.msra.mxu0 0.0
    %356 = vmatprep.subr.mxu0 0.0
    %357 = vmatpush1.xpose.msra.mxu0 0.0
    %358 = vmatprep.subr.mxu0 0.0
    %359 = vmatpush1.xpose.msra.mxu0 0.0
    %360 = vmatprep.subr.mxu0 0.0
    %361 = vmatpush1.xpose.msra.mxu0 0.0
    %362 = vmatprep.subr.mxu0 0.0
    %363 = vmatpush1.xpose.msra.mxu0 0.0
    %364 = vmatprep.subr.mxu0 0.0
    %365 = vmatpush1.xpose.msra.mxu0 0.0
    %366 = vmatprep.subr.mxu0 0.0
    %367 = vmatpush1.xpose.msra.mxu0 0.0
    %368 = vmatprep.subr.mxu0 0.0
    %369 = vmatpush1.xpose.msra.mxu0 0.0
    %370 = vmatprep.subr.mxu0 0.0
    %371 = vmatpush1.xpose.msra.mxu0 0.0
    %372 = vmatprep.subr.mxu0 0.0
    %373 = vmatpush1.xpose.msra.mxu0 0.0
    %374 = vmatprep.subr.mxu0 0.0
    %375 = vmatpush1.xpose.msra.mxu0 0.0
    %376 = vmatprep.subr.mxu0 0.0
    %377 = vmatpush1.xpose.msra.mxu0 0.0
    %378 = vmatprep.subr.mxu0 0.0
    %379 = vmatpush1.xpose.msra.mxu0 0.0
    %380 = vmatprep.subr.mxu0 0.0
    %381 = vmatpush1.xpose.msra.mxu0 0.0
    %382 = vmatprep.subr.mxu0 0.0
    %383 = vmatpush1.xpose.msra.mxu0 0.0
    %384 = vmatprep.subr.mxu0 0.0
    %385 = vmatpush1.xpose.msra.mxu0 0.0
    %386 = vmatprep.subr.mxu0 0.0
    %387 = vmatpush1.xpose.msra.mxu0 0.0
    %388 = vmatprep.subr.mxu0 0.0
    %389 = vmatpush1.xpose.msra.mxu0 0.0
    %390 = vmatprep.subr.mxu0 0.0
    %391 = vmatpush1.xpose.msra.mxu0 0.0
    %392 = vmatprep.subr.mxu0 0.0
    %393 = vmatpush1.xpose.msra.mxu0 0.0
    %394 = vmatprep.subr.mxu0 0.0
    %395 = vmatpush1.xpose.msra.mxu0 0.0
    %396 = vmatprep.mubr.f32.mxu0 0.0
    %397 = vmatmul.mubr.f32.gmra.mrb[0].mxu0 %v327
    %v398 = vpop.f32.mrb[0].mxu0
    %v399 = vadd.f32 0.0, %v398
    %v400 = vpop.f32.mrb[0].mxu0
    %401 = vdwg.mxu0
    %v403 = vsel %vm306, %v59, 0
    %v406 = vsel %vm306, %v60, 0
    %v409 = vsel %vm306, %v61, 0
    %v412 = vsel %vm306, %v62, 0
    %v415 = vsel %vm306, %v63, 0
    %v418 = vsel %vm306, %v64, 0
    %v421 = vsel %vm306, %v65, 0
    %v424 = vsel %vm306, %v66, 0
    %426 = vmatprep.subr.mxu0 0.0
    %427 = vmatpush1.xpose.msra.mxu0 %v403
    %428 = vmatprep.subr.mxu0 0.0
    %429 = vmatpush1.xpose.msra.mxu0 %v406
    %430 = vmatprep.subr.mxu0 0.0
    %431 = vmatpush1.xpose.msra.mxu0 %v409
    %432 = vmatprep.subr.mxu0 0.0
    %433 = vmatpush1.xpose.msra.mxu0 %v412
    %434 = vmatprep.subr.mxu0 0.0
    %435 = vmatpush1.xpose.msra.mxu0 %v415
    %436 = vmatprep.subr.mxu0 0.0
    %437 = vmatpush1.xpose.msra.mxu0 %v418
    %438 = vmatprep.subr.mxu0 0.0
    %439 = vmatpush1.xpose.msra.mxu0 %v421
    %440 = vmatprep.subr.mxu0 0.0
    %441 = vmatpush1.xpose.msra.mxu0 %v424
    %442 = vmatprep.subr.mxu0 0.0
    %443 = vmatpush1.xpose.msra.mxu0 0.0
    %444 = vmatprep.subr.mxu0 0.0
    %445 = vmatpush1.xpose.msra.mxu0 0.0
    %446 = vmatprep.subr.mxu0 0.0
    %447 = vmatpush1.xpose.msra.mxu0 0.0
    %448 = vmatprep.subr.mxu0 0.0
    %449 = vmatpush1.xpose.msra.mxu0 0.0
    %450 = vmatprep.subr.mxu0 0.0
    %451 = vmatpush1.xpose.msra.mxu0 0.0
    %452 = vmatprep.subr.mxu0 0.0
    %453 = vmatpush1.xpose.msra.mxu0 0.0
    %454 = vmatprep.subr.mxu0 0.0
    %455 = vmatpush1.xpose.msra.mxu0 0.0
    %456 = vmatprep.subr.mxu0 0.0
    %457 = vmatpush1.xpose.msra.mxu0 0.0
    %458 = vmatprep.subr.mxu0 0.0
    %459 = vmatpush1.xpose.msra.mxu0 0.0
    %460 = vmatprep.subr.mxu0 0.0
    %461 = vmatpush1.xpose.msra.mxu0 0.0
    %462 = vmatprep.subr.mxu0 0.0
    %463 = vmatpush1.xpose.msra.mxu0 0.0
    %464 = vmatprep.subr.mxu0 0.0
    %465 = vmatpush1.xpose.msra.mxu0 0.0
    %466 = vmatprep.subr.mxu0 0.0
    %467 = vmatpush1.xpose.msra.mxu0 0.0
    %468 = vmatprep.subr.mxu0 0.0
    %469 = vmatpush1.xpose.msra.mxu0 0.0
    %470 = vmatprep.subr.mxu0 0.0
    %471 = vmatpush1.xpose.msra.mxu0 0.0
    %472 = vmatprep.subr.mxu0 0.0
    %473 = vmatpush1.xpose.msra.mxu0 0.0
    %474 = vmatprep.subr.mxu0 0.0
    %475 = vmatpush1.xpose.msra.mxu0 0.0
    %476 = vmatprep.subr.mxu0 0.0
    %477 = vmatpush1.xpose.msra.mxu0 0.0
    %478 = vmatprep.subr.mxu0 0.0
    %479 = vmatpush1.xpose.msra.mxu0 0.0
    %480 = vmatprep.subr.mxu0 0.0
    %481 = vmatpush1.xpose.msra.mxu0 0.0
    %482 = vmatprep.subr.mxu0 0.0
    %483 = vmatpush1.xpose.msra.mxu0 0.0
    %484 = vmatprep.subr.mxu0 0.0
    %485 = vmatpush1.xpose.msra.mxu0 0.0
    %486 = vmatprep.subr.mxu0 0.0
    %487 = vmatpush1.xpose.msra.mxu0 0.0
    %488 = vmatprep.subr.mxu0 0.0
    %489 = vmatpush1.xpose.msra.mxu0 0.0
    %490 = vmatprep.mubr.f32.mxu0 0.0
    %491 = vmatmul.mubr.f32.gmra.mrb[0].mxu0 %v330
    %v492 = vpop.f32.mrb[0].mxu0
    %v493 = vadd.f32 0.0, %v492
    %v494 = vpop.f32.mrb[0].mxu0
    %495 = vdwg.mxu0
    %v496 = vmul.f32 %v493, %v227
    %v497 = vsel %vm233, %v496, 0.0
    %v498 = vrot.slane %v497, 4
    %v499 = vadd.f32 %v497, %v498
    %v500 = vrot.slane %v499, 2
    %v501 = vadd.f32 %v499, %v500
    %v502 = vrot.slane %v501, 1
    %v503 = vadd.f32 %v501, %v502
    %505 = vrot.lane.b32.xlu0 %v503, 64
    %v506 = vpop.permute.xlu0 %505
    %v508 = vsel %vm233, %v139, %v506
    %v510 = vrot.slane %v67, 1
    %512 = vmatprep.subr.mxu0 0.0
    %513 = vmatpush1.msra.mxu0 %v35
    %514 = vmatprep.subr.mxu0 0.0
    %515 = vmatpush1.msra.mxu0 %v36
    %516 = vmatprep.subr.mxu0 0.0
    %517 = vmatpush1.msra.mxu0 %v37
    %518 = vmatprep.subr.mxu0 0.0
    %519 = vmatpush1.msra.mxu0 %v38
    %520 = vmatprep.subr.mxu0 0.0
    %521 = vmatpush1.msra.mxu0 %v39
    %522 = vmatprep.subr.mxu0 0.0
    %523 = vmatpush1.msra.mxu0 %v40
    %524 = vmatprep.subr.mxu0 0.0
    %525 = vmatpush1.msra.mxu0 %v41
    %526 = vmatprep.subr.mxu0 0.0
    %527 = vmatpush1.msra.mxu0 %v42
    %528 = vmatprep.subr.mxu0 0.0
    %529 = vmatpush1.msra.mxu0 %v43
    %530 = vmatprep.subr.mxu0 0.0
    %531 = vmatpush1.msra.mxu0 %v44
    %532 = vmatprep.subr.mxu0 0.0
    %533 = vmatpush1.msra.mxu0 %v45
    %534 = vmatprep.subr.mxu0 0.0
    %535 = vmatpush1.msra.mxu0 %v46
    %536 = vmatprep.subr.mxu0 0.0
    %537 = vmatpush1.msra.mxu0 %v47
    %538 = vmatprep.subr.mxu0 0.0
    %539 = vmatpush1.msra.mxu0 %v48
    %540 = vmatprep.subr.mxu0 0.0
    %541 = vmatpush1.msra.mxu0 %v49
    %542 = vmatprep.subr.mxu0 0.0
    %543 = vmatpush1.msra.mxu0 %v50
    %544 = vmatprep.subr.mxu0 0.0
    %545 = vmatpush1.msra.mxu0 0.0
    %546 = vmatprep.subr.mxu0 0.0
    %547 = vmatpush1.msra.mxu0 0.0
    %548 = vmatprep.subr.mxu0 0.0
    %549 = vmatpush1.msra.mxu0 0.0
    %550 = vmatprep.subr.mxu0 0.0
    %551 = vmatpush1.msra.mxu0 0.0
    %552 = vmatprep.subr.mxu0 0.0
    %553 = vmatpush1.msra.mxu0 0.0
    %554 = vmatprep.subr.mxu0 0.0
    %555 = vmatpush1.msra.mxu0 0.0
    %556 = vmatprep.subr.mxu0 0.0
    %557 = vmatpush1.msra.mxu0 0.0
    %558 = vmatprep.subr.mxu0 0.0
    %559 = vmatpush1.msra.mxu0 0.0
    %560 = vmatprep.subr.mxu0 0.0
    %561 = vmatpush1.msra.mxu0 0.0
    %562 = vmatprep.subr.mxu0 0.0
    %563 = vmatpush1.msra.mxu0 0.0
    %564 = vmatprep.subr.mxu0 0.0
    %565 = vmatpush1.msra.mxu0 0.0
    %566 = vmatprep.subr.mxu0 0.0
    %567 = vmatpush1.msra.mxu0 0.0
    %568 = vmatprep.subr.mxu0 0.0
    %569 = vmatpush1.msra.mxu0 0.0
    %570 = vmatprep.subr.mxu0 0.0
    %571 = vmatpush1.msra.mxu0 0.0
    %572 = vmatprep.subr.mxu0 0.0
    %573 = vmatpush1.msra.mxu0 0.0
    %574 = vmatprep.subr.mxu0 0.0
    %575 = vmatpush1.msra.mxu0 0.0
    %576 = vmatprep.mubr.f32.mxu0 0.0
    %577 = vmatmul.mubr.f32.gmra.mrb[0].mxu0 %v508
    %v578 = vpop.f32.mrb[0].mxu0
    %v579 = vadd.f32 %v510, %v578
    %v580 = vpop.f32.mrb[0].mxu0
    %581 = vdwg.mxu0
    %v582 = vmax.f32 %v579, 0.0
    %583 = vrot.lane.b32.xlu0 %v510, 64
    %v584 = vpop.permute.xlu0 %583
    %v587 = vsel %vm233, %v582, 0
    %589 = vmatprep.subr.mxu0 0.0
    %590 = vmatpush1.msra.mxu0 %v51
    %591 = vmatprep.subr.mxu0 0.0
    %592 = vmatpush1.msra.mxu0 %v52
    %593 = vmatprep.subr.mxu0 0.0
    %594 = vmatpush1.msra.mxu0 %v53
    %595 = vmatprep.subr.mxu0 0.0
    %596 = vmatpush1.msra.mxu0 %v54
    %597 = vmatprep.subr.mxu0 0.0
    %598 = vmatpush1.msra.mxu0 %v55
    %599 = vmatprep.subr.mxu0 0.0
    %600 = vmatpush1.msra.mxu0 %v56
    %601 = vmatprep.subr.mxu0 0.0
    %602 = vmatpush1.msra.mxu0 %v57
    %603 = vmatprep.subr.mxu0 0.0
    %604 = vmatpush1.msra.mxu0 %v58
    %605 = vmatprep.subr.mxu0 0.0
    %606 = vmatpush1.msra.mxu0 0.0
    %607 = vmatprep.subr.mxu0 0.0
    %608 = vmatpush1.msra.mxu0 0.0
    %609 = vmatprep.subr.mxu0 0.0
    %610 = vmatpush1.msra.mxu0 0.0
    %611 = vmatprep.subr.mxu0 0.0
    %612 = vmatpush1.msra.mxu0 0.0
    %613 = vmatprep.subr.mxu0 0.0
    %614 = vmatpush1.msra.mxu0 0.0
    %615 = vmatprep.subr.mxu0 0.0
    %616 = vmatpush1.msra.mxu0 0.0
    %617 = vmatprep.subr.mxu0 0.0
    %618 = vmatpush1.msra.mxu0 0.0
    %619 = vmatprep.subr.mxu0 0.0
    %620 = vmatpush1.msra.mxu0 0.0
    %621 = vmatprep.subr.mxu0 0.0
    %622 = vmatpush1.msra.mxu0 0.0
    %623 = vmatprep.subr.mxu0 0.0
    %624 = vmatpush1.msra.mxu0 0.0
    %625 = vmatprep.subr.mxu0 0.0
    %626 = vmatpush1.msra.mxu0 0.0
    %627 = vmatprep.subr.mxu0 0.0
    %628 = vmatpush1.msra.mxu0 0.0
    %629 = vmatprep.subr.mxu0 0.0
    %630 = vmatpush1.msra.mxu0 0.0
    %631 = vmatprep.subr.mxu0 0.0
    %632 = vmatpush1.msra.mxu0 0.0
    %633 = vmatprep.subr.mxu0 0.0
    %634 = vmatpush1.msra.mxu0 0.0
    %635 = vmatprep.subr.mxu0 0.0
    %636 = vmatpush1.msra.mxu0 0.0
    %637 = vmatprep.subr.mxu0 0.0
    %638 = vmatpush1.msra.mxu0 0.0
    %639 = vmatprep.subr.mxu0 0.0
    %640 = vmatpush1.msra.mxu0 0.0
    %641 = vmatprep.subr.mxu0 0.0
    %642 = vmatpush1.msra.mxu0 0.0
    %643 = vmatprep.subr.mxu0 0.0
    %644 = vmatpush1.msra.mxu0 0.0
    %645 = vmatprep.subr.mxu0 0.0
    %646 = vmatpush1.msra.mxu0 0.0
    %647 = vmatprep.subr.mxu0 0.0
    %648 = vmatpush1.msra.mxu0 0.0
    %649 = vmatprep.subr.mxu0 0.0
    %650 = vmatpush1.msra.mxu0 0.0
    %651 = vmatprep.subr.mxu0 0.0
    %652 = vmatpush1.msra.mxu0 0.0
    %653 = vmatprep.mubr.f32.mxu0 0.0
    %654 = vmatmul.mubr.f32.gmra.mrb[0].mxu0 %v587
    %v655 = vpop.f32.mrb[0].mxu0
    %v656 = vadd.f32 %v584, %v655
    %v657 = vpop.f32.mrb[0].mxu0
    %658 = vdwg.mxu0
    %660 = vrot.lane.b32.xlu0 %v399, 64
    %v661 = vpop.permute.xlu0 %660
    %v663 = vsel %vm233, %v656, %v661
    %vm664 = vcmask 588800
    %v665 = vsel %vm664, %v663, 0.0
    %666 = vst [vmem:[%s3] sm:$0x1] %v665
    // Predicated region
    $region18: #{emotional_memory_forward.1} parent=1 // pred_check
      _
    $region19: #{emotional_memory_forward.1} parent=1 // pred_check_branch
      %668 = sbr.rel (0) target = $region21
    $region20: #{emotional_memory_forward.1} parent=1 // pred_region
      _
    $region21: #{emotional_memory_forward.1} parent=1 // pred_fallthru
      _
    // Predicated region
    $region22: #{emotional_memory_forward.1} parent=1 // pred_check
      _
    $region23: #{emotional_memory_forward.1} parent=1 // pred_check_branch
      %670 = sbr.rel (0) target = $region25
    $region24: #{emotional_memory_forward.1} parent=1 // pred_region
      _
    $region25: #{emotional_memory_forward.1} parent=1 // pred_fallthru
      _
    %671 = vsyncpa [#allocation3], 1

</llo_original>
